<compile_context>
chip_gen: v6e
topology: v6e:2x2x1
jax: 0.10.0
libtpu: 0.0.40
codegen_flags: <defaults>
</compile_context>

<pallas_src>
import math
import functools

import jax
import jax.numpy as jnp
from jax.experimental import pallas as pl
from jax.experimental.pallas import tpu as pltpu


_INV_SQRT2 = 1.0 / math.sqrt(2.0)


def _gelu_erf(x):
    # exact (erf-based) gelu matching the PyTorch reference, in f32
    return x * 0.5 * (1.0 + jax.lax.erf(x * _INV_SQRT2))


def _ln_epilogue(y, x_resid, gamma, beta, eps, out_dtype):
    # dropout (eval) is identity; residual add + LayerNorm over the full hidden axis
    z = y + x_resid
    mean = jnp.mean(z, axis=-1, keepdims=True)
    var = jnp.mean(jnp.square(z - mean), axis=-1, keepdims=True)   # biased, like torch
    out = (z - mean) * jax.lax.rsqrt(var + eps)
    out = out * gamma + beta
    return out.astype(out_dtype)


def _ffn_kernel_fused(x_ref, w1_ref, b1_ref, w2_ref, b2_ref, gamma_ref, beta_ref,
                      o_ref, *, eps):
    # Whole inner dimension resident: single pass, no accumulator scratch.
    h = jnp.dot(x_ref[...], w1_ref[...], preferred_element_type=jnp.float32)
    h = h + b1_ref[...].astype(jnp.float32)
    h = _gelu_erf(h)
    y = jnp.dot(h.astype(w2_ref.dtype), w2_ref[...],
                preferred_element_type=jnp.float32)
    y = y + b2_ref[...].astype(jnp.float32)
    o_ref[...] = _ln_epilogue(y, x_ref[...].astype(jnp.float32),
                              gamma_ref[...].astype(jnp.float32),
                              beta_ref[...].astype(jnp.float32),
                              eps, o_ref.dtype)


def _ffn_kernel_chunked(x_ref, w1_ref, b1_ref, w2_ref, b2_ref, gamma_ref, beta_ref,
                        o_ref, acc_ref, *, eps):
    k = pl.program_id(1)

    @pl.when(k == 0)
    def _init():
        acc_ref[...] = jnp.zeros_like(acc_ref)

    # dense_1 chunk: (TM, H) @ (H, TI) on the MXU, f32 accumulation
    h = jnp.dot(x_ref[...], w1_ref[...], preferred_element_type=jnp.float32)
    h = h + b1_ref[...].astype(jnp.float32)
    h = _gelu_erf(h)
    # dense_2 partial: (TM, TI) @ (TI, H), accumulate into f32 VMEM scratch
    acc_ref[...] += jnp.dot(h.astype(w2_ref.dtype), w2_ref[...],
                            preferred_element_type=jnp.float32)

    @pl.when(k == pl.num_programs(1) - 1)
    def _finalize():
        y = acc_ref[...] + b2_ref[...].astype(jnp.float32)
        o_ref[...] = _ln_epilogue(y, x_ref[...].astype(jnp.float32),
                                  gamma_ref[...].astype(jnp.float32),
                                  beta_ref[...].astype(jnp.float32),
                                  eps, o_ref.dtype)


def _round_up(a, m):
    return ((a + m - 1) // m) * m


def feed_forward(x, w1, b1, w2, b2, gamma, beta, *, eps,
                 tile_rows=256, tile_inner=512):
    """x: (batch, seq, hidden). Returns same shape/dtype.

    w1: (hidden, inner), b1: (inner,), w2: (inner, hidden), b2: (hidden,)
    gamma/beta: (hidden,)

    tile_rows: row tile (default 256; ~128 is reasonable on v5e).
    tile_inner: chunk of the inner (reduction) dimension kept resident per step.
    The hidden axis H is never tiled — the in-kernel LayerNorm needs each block
    to span the full hidden dimension.
    """
    B, S, H = x.shape
    I = w1.shape[1]
    rows = B * S

    # sublane granule: 16 for bf16 packing, 8 for 32-bit dtypes
    sub = 16 if x.dtype == jnp.bfloat16 else 8

    tm = min(_round_up(tile_rows, sub), _round_up(rows, sub))
    if I <= tile_inner:
        ti = I                              # full extent -> always a legal block
    else:
        ti = _round_up(tile_inner, 128)     # lane-aligned reduction chunk

    rows_p = _round_up(rows, tm)
    inner_p = _round_up(I, ti)

    x2 = x.reshape(rows, H)
    if rows_p != rows:
        x2 = jnp.pad(x2, ((0, rows_p - rows), (0, 0)))
    w1p, b1p, w2p = w1, b1, w2
    if inner_p != I:
        # zero padding of the inner dim is exact: gelu(0) = 0, zero rows of w2 add 0
        w1p = jnp.pad(w1, ((0, 0), (0, inner_p - I)))
        b1p = jnp.pad(b1, ((0, inner_p - I),))
        w2p = jnp.pad(w2, ((0, inner_p - I), (0, 0)))

    b1_2 = b1p.reshape(1, inner_p)
    b2_2 = b2.reshape(1, H)
    gamma2 = gamma.reshape(1, H)
    beta2 = beta.reshape(1, H)

    nr = rows_p // tm
    nk = inner_p // ti

    xb = x.dtype.itemsize
    wb = w1.dtype.itemsize
    # rough VMEM footprint (double-buffered pipelined blocks + f32 accumulator)
    est = (2 * tm * H * xb            # x tile
           + 2 * H * ti * wb          # w1 chunk
           + 2 * ti * H * wb          # w2 chunk
           + 2 * 8 * ti * wb          # b1 chunk (sublane padded)
           + 2 * 3 * 8 * H * 4        # b2 / gamma / beta
           + 2 * tm * H * xb          # output tile
           + (tm * H * 4 if nk > 1 else 0))   # accumulator scratch (chunked path only)
    vmem_limit = int(min(max(int(est * 1.5), 32 * 1024 * 1024), 64 * 1024 * 1024))

    cost = pl.CostEstimate(
        flops=4 * rows_p * H * inner_p,             # two matmuls
        transcendentals=rows_p * inner_p,           # erf
        bytes_accessed=(rows_p * H * xb * 2         # x in + out
                        + 2 * inner_p * H * wb      # w1 + w2
                        + (inner_p + 3 * H) * 4))

    if nk == 1:
        out2 = pl.pallas_call(
            functools.partial(_ffn_kernel_fused, eps=eps),
            out_shape=jax.ShapeDtypeStruct((rows_p, H), x.dtype),
            grid_spec=pltpu.PrefetchScalarGridSpec(
                num_scalar_prefetch=0,
                grid=(nr,),
                in_specs=[
                    pl.BlockSpec((tm, H), lambda i: (i, 0)),        # x tile
                    pl.BlockSpec((H, inner_p), lambda i: (0, 0)),   # w1 (fetched once)
                    pl.BlockSpec((1, inner_p), lambda i: (0, 0)),   # b1
                    pl.BlockSpec((inner_p, H), lambda i: (0, 0)),   # w2 (fetched once)
                    pl.BlockSpec((1, H), lambda i: (0, 0)),         # b2
                    pl.BlockSpec((1, H), lambda i: (0, 0)),         # gamma
                    pl.BlockSpec((1, H), lambda i: (0, 0)),         # beta
                ],
                out_specs=pl.BlockSpec((tm, H), lambda i: (i, 0)),
            ),
            compiler_params=pltpu.CompilerParams(
                dimension_semantics=("parallel",),
                vmem_limit_bytes=vmem_limit),
            cost_estimate=cost,
        )(x2, w1p, b1_2, w2p, b2_2, gamma2, beta2)
    else:
        out2 = pl.pallas_call(
            functools.partial(_ffn_kernel_chunked, eps=eps),
            out_shape=jax.ShapeDtypeStruct((rows_p, H), x.dtype),
            grid_spec=pltpu.PrefetchScalarGridSpec(
                num_scalar_prefetch=0,
                grid=(nr, nk),
                in_specs=[
                    pl.BlockSpec((tm, H), lambda i, k: (i, 0)),     # x (resident across k)
                    pl.BlockSpec((H, ti), lambda i, k: (0, k)),     # w1 chunk
                    pl.BlockSpec((1, ti), lambda i, k: (0, k)),     # b1 chunk
                    pl.BlockSpec((ti, H), lambda i, k: (k, 0)),     # w2 chunk
                    pl.BlockSpec((1, H), lambda i, k: (0, 0)),      # b2   (fetched once)
                    pl.BlockSpec((1, H), lambda i, k: (0, 0)),      # gamma
                    pl.BlockSpec((1, H), lambda i, k: (0, 0)),      # beta
                ],
                out_specs=pl.BlockSpec((tm, H), lambda i, k: (i, 0)),  # resident across k
                scratch_shapes=[pltpu.VMEM((tm, H), jnp.float32)],
            ),
            compiler_params=pltpu.CompilerParams(
                dimension_semantics=("parallel", "arbitrary"),
                vmem_limit_bytes=vmem_limit),
            cost_estimate=cost,
        )(x2, w1p, b1_2, w2p, b2_2, gamma2, beta2)

    return out2[:rows].reshape(B, S, H)


def _reference(x, w1, b1, w2, b2, gamma, beta, eps):
    # pure-JAX reference mirroring the PyTorch module (eval mode)
    h = x @ w1 + b1
    h = h * 0.5 * (1.0 + jax.lax.erf(h / math.sqrt(2.0)))
    y = h @ w2 + b2
    z = y + x
    mean = jnp.mean(z, axis=-1, keepdims=True)
    var = jnp.mean(jnp.square(z - mean), axis=-1, keepdims=True)
    return (z - mean) * jax.lax.rsqrt(var + eps) * gamma + beta


if __name__ == "__main__":
    key = jax.random.PRNGKey(0)
    batch, seq, hidden, inner = 2, 8, 32, 64
    eps = 1e-12

    k_x, k_w1, k_b1, k_w2, k_b2 = jax.random.split(key, 5)

    x = jax.random.normal(k_x, (batch, seq, hidden), dtype=jnp.float32)

    # deterministic parameter init (Linear weights stored as (in, out))
    lim1 = 1.0 / math.sqrt(hidden)
    lim2 = 1.0 / math.sqrt(inner)
    w1 = jax.random.uniform(k_w1, (hidden, inner), minval=-lim1, maxval=lim1, dtype=jnp.float32)
    b1 = jax.random.uniform(k_b1, (inner,), minval=-lim1, maxval=lim1, dtype=jnp.float32)
    w2 = jax.random.uniform(k_w2, (inner, hidden), minval=-lim2, maxval=lim2, dtype=jnp.float32)
    b2 = jax.random.uniform(k_b2, (hidden,), minval=-lim2, maxval=lim2, dtype=jnp.float32)
    gamma = jnp.ones((hidden,), dtype=jnp.float32)
    beta = jnp.zeros((hidden,), dtype=jnp.float32)

    out = feed_forward(x, w1, b1, w2, b2, gamma, beta, eps=eps)
    out = jax.block_until_ready(out)

    ref = _reference(x, w1, b1, w2, b2, gamma, beta, eps)
    assert out.shape == x.shape
    assert jnp.allclose(out, ref, atol=1e-5, rtol=1e-5), "mismatch vs reference (fused path)"

    # Exercise the padding / multi-chunk reduction path (rows and inner not multiples
    # of the tile sizes, inner larger than the chunk size).
    B2, S2, H2, I2 = 2, 37, 128, 640
    kx2, kw1, kb1, kw2, kb2 = jax.random.split(jax.random.PRNGKey(1), 5)
    x_b = jax.random.normal(kx2, (B2, S2, H2), dtype=jnp.float32)
    w1_b = jax.random.normal(kw1, (H2, I2), dtype=jnp.float32) * 0.05
    b1_b = jax.random.normal(kb1, (I2,), dtype=jnp.float32) * 0.05
    w2_b = jax.random.normal(kw2, (I2, H2), dtype=jnp.float32) * 0.05
    b2_b = jax.random.normal(kb2, (H2,), dtype=jnp.float32) * 0.05
    g_b = jnp.ones((H2,), dtype=jnp.float32)
    be_b = jnp.zeros((H2,), dtype=jnp.float32)

    out_b = feed_forward(x_b, w1_b, b1_b, w2_b, b2_b, g_b, be_b,
                         eps=1e-12, tile_rows=32, tile_inner=256)
    out_b = jax.block_until_ready(out_b)
    ref_b = _reference(x_b, w1_b, b1_b, w2_b, b2_b, g_b, be_b, 1e-12)
    assert jnp.allclose(out_b, ref_b, atol=1e-4, rtol=1e-4), \
        "mismatch vs reference (padded/chunked path)"

    # TODO(synk): dropout is treated as identity (inference mode); training-mode
    # dropout would need pltpu.prng_seed/prng_random_bits masking in-kernel.
    print("KERNEL_OK")
</pallas_src>

<mosaic_0001>
module attributes {stable_mosaic.version = 11 : i64} {
  func.func @_ffn_kernel_fused(%arg0: i32, %arg1: memref<16x32xf32, #tpu.memory_space<vmem>>, %arg2: memref<32x64xf32, #tpu.memory_space<vmem>>, %arg3: memref<1x64xf32, #tpu.memory_space<vmem>>, %arg4: memref<64x32xf32, #tpu.memory_space<vmem>>, %arg5: memref<1x32xf32, #tpu.memory_space<vmem>>, %arg6: memref<1x32xf32, #tpu.memory_space<vmem>>, %arg7: memref<1x32xf32, #tpu.memory_space<vmem>>, %arg8: memref<16x32xf32, #tpu.memory_space<vmem>>) attributes {dimension_semantics = [#tpu.dimension_semantics<parallel>], iteration_bounds = array<i64: 1>, scalar_prefetch = 0 : i64, scratch_operands = 0 : i64, tpu.core_type = #tpu.core_type<tc>, window_params = [{transform_indices = @transform_0, window_bounds = array<i64: 16, 32>}, {pipeline_mode = #tpu.pipeline_mode<synchronous>, transform_indices = @transform_1, window_bounds = array<i64: 32, 64>}, {pipeline_mode = #tpu.pipeline_mode<synchronous>, transform_indices = @transform_2, window_bounds = array<i64: 1, 64>}, {pipeline_mode = #tpu.pipeline_mode<synchronous>, transform_indices = @transform_3, window_bounds = array<i64: 64, 32>}, {pipeline_mode = #tpu.pipeline_mode<synchronous>, transform_indices = @transform_4, window_bounds = array<i64: 1, 32>}, {pipeline_mode = #tpu.pipeline_mode<synchronous>, transform_indices = @transform_5, window_bounds = array<i64: 1, 32>}, {pipeline_mode = #tpu.pipeline_mode<synchronous>, transform_indices = @transform_6, window_bounds = array<i64: 1, 32>}, {transform_indices = @transform_7, window_bounds = array<i64: 16, 32>}]} {
    %c0 = arith.constant 0 : index
    %c0_0 = arith.constant 0 : index
    %0 = vector.load %arg1[%c0, %c0_0] : memref<16x32xf32, #tpu.memory_space<vmem>>, vector<16x32xf32>
    %c0_1 = arith.constant 0 : index
    %c0_2 = arith.constant 0 : index
    %1 = vector.load %arg2[%c0_1, %c0_2] : memref<32x64xf32, #tpu.memory_space<vmem>>, vector<32x64xf32>
    %cst = arith.constant dense<0.000000e+00> : vector<16x64xf32>
    %2 = tpu.matmul %0, %1, %cst {dimension_numbers = #tpu.dot_dimension_numbers<[1], [0], [0], [1], [0, 0, 1, 1], [], []>} : vector<16x32xf32>, vector<32x64xf32>, vector<16x64xf32> -> vector<16x64xf32>
    %c0_3 = arith.constant 0 : index
    %c0_4 = arith.constant 0 : index
    %3 = vector.load %arg3[%c0_3, %c0_4] : memref<1x64xf32, #tpu.memory_space<vmem>>, vector<1x64xf32>
    %4 = vector.broadcast %3 : vector<1x64xf32> to vector<16x64xf32>
    %5 = arith.addf %2, %4 : vector<16x64xf32>
    %cst_5 = arith.constant 5.000000e-01 : f32
    %6 = vector.broadcast %cst_5 : f32 to vector<16x64xf32>
    %7 = arith.mulf %5, %6 : vector<16x64xf32>
    %cst_6 = arith.constant 0.707106769 : f32
    %8 = vector.broadcast %cst_6 : f32 to vector<16x64xf32>
    %9 = arith.mulf %5, %8 : vector<16x64xf32>
    %10 = math.erf %9 : vector<16x64xf32>
    %cst_7 = arith.constant 1.000000e+00 : f32
    %11 = vector.broadcast %cst_7 : f32 to vector<16x64xf32>
    %12 = arith.addf %11, %10 : vector<16x64xf32>
    %13 = arith.mulf %7, %12 : vector<16x64xf32>
    %c0_8 = arith.constant 0 : index
    %c0_9 = arith.constant 0 : index
    %14 = vector.load %arg4[%c0_8, %c0_9] : memref<64x32xf32, #tpu.memory_space<vmem>>, vector<64x32xf32>
    %cst_10 = arith.constant dense<0.000000e+00> : vector<16x32xf32>
    %15 = tpu.matmul %13, %14, %cst_10 {dimension_numbers = #tpu.dot_dimension_numbers<[1], [0], [0], [1], [0, 0, 1, 1], [], []>} : vector<16x64xf32>, vector<64x32xf32>, vector<16x32xf32> -> vector<16x32xf32>
    %c0_11 = arith.constant 0 : index
    %c0_12 = arith.constant 0 : index
    %16 = vector.load %arg5[%c0_11, %c0_12] : memref<1x32xf32, #tpu.memory_space<vmem>>, vector<1x32xf32>
    %17 = vector.broadcast %16 : vector<1x32xf32> to vector<16x32xf32>
    %18 = arith.addf %15, %17 : vector<16x32xf32>
    %c0_13 = arith.constant 0 : index
    %c0_14 = arith.constant 0 : index
    %19 = vector.load %arg1[%c0_13, %c0_14] : memref<16x32xf32, #tpu.memory_space<vmem>>, vector<16x32xf32>
    %c0_15 = arith.constant 0 : index
    %c0_16 = arith.constant 0 : index
    %20 = vector.load %arg6[%c0_15, %c0_16] : memref<1x32xf32, #tpu.memory_space<vmem>>, vector<1x32xf32>
    %c0_17 = arith.constant 0 : index
    %c0_18 = arith.constant 0 : index
    %21 = vector.load %arg7[%c0_17, %c0_18] : memref<1x32xf32, #tpu.memory_space<vmem>>, vector<1x32xf32>
    %22 = arith.addf %18, %19 : vector<16x32xf32>
    %cst_19 = arith.constant dense<0.000000e+00> : vector<16xf32>
    %23 = vector.multi_reduction <add>, %22, %cst_19 [1] : vector<16x32xf32> to vector<16xf32>
    %24 = vector.shape_cast %23 : vector<16xf32> to vector<16x1xf32>
    %cst_20 = arith.constant 3.200000e+01 : f32
    %25 = vector.broadcast %cst_20 : f32 to vector<16x1xf32>
    %26 = arith.divf %24, %25 : vector<16x1xf32>
    %27 = vector.broadcast %26 : vector<16x1xf32> to vector<16x32xf32>
    %28 = arith.subf %22, %27 : vector<16x32xf32>
    %29 = arith.mulf %28, %28 : vector<16x32xf32>
    %cst_21 = arith.constant dense<0.000000e+00> : vector<16xf32>
    %30 = vector.multi_reduction <add>, %29, %cst_21 [1] : vector<16x32xf32> to vector<16xf32>
    %31 = vector.shape_cast %30 : vector<16xf32> to vector<16x1xf32>
    %cst_22 = arith.constant 3.200000e+01 : f32
    %32 = vector.broadcast %cst_22 : f32 to vector<16x1xf32>
    %33 = arith.divf %31, %32 : vector<16x1xf32>
    %34 = vector.broadcast %26 : vector<16x1xf32> to vector<16x32xf32>
    %35 = arith.subf %22, %34 : vector<16x32xf32>
    %cst_23 = arith.constant 9.99999996E-13 : f32
    %36 = vector.broadcast %cst_23 : f32 to vector<16x1xf32>
    %37 = arith.addf %33, %36 : vector<16x1xf32>
    %38 = math.rsqrt %37 : vector<16x1xf32>
    %39 = vector.broadcast %38 : vector<16x1xf32> to vector<16x32xf32>
    %40 = arith.mulf %35, %39 : vector<16x32xf32>
    %41 = vector.broadcast %20 : vector<1x32xf32> to vector<16x32xf32>
    %42 = arith.mulf %40, %41 : vector<16x32xf32>
    %43 = vector.broadcast %21 : vector<1x32xf32> to vector<16x32xf32>
    %44 = arith.addf %42, %43 : vector<16x32xf32>
    %c0_24 = arith.constant 0 : index
    %c0_25 = arith.constant 0 : index
    %45 = vector.load %arg8[%c0_24, %c0_25] : memref<16x32xf32, #tpu.memory_space<vmem>>, vector<16x32xf32>
    tpu.vector_store %arg8[%c0_24, %c0_25], %44 {strides = array<i32>} : memref<16x32xf32, #tpu.memory_space<vmem>>, vector<16x32xf32>,
    return
  }
  func.func @transform_0(%arg0: i32) -> (i32, i32) {
    %c0_i32 = arith.constant 0 : i32
    %c0_i32_0 = arith.constant 0 : i32
    return %arg0, %c0_i32 : i32, i32
  }
  func.func @transform_1(%arg0: i32) -> (i32, i32) {
    %c0_i32 = arith.constant 0 : i32
    %c0_i32_0 = arith.constant 0 : i32
    %c0_i32_1 = arith.constant 0 : i32
    return %c0_i32, %c0_i32_0 : i32, i32
  }
  func.func @transform_2(%arg0: i32) -> (i32, i32) {
    %c0_i32 = arith.constant 0 : i32
    %c0_i32_0 = arith.constant 0 : i32
    %c0_i32_1 = arith.constant 0 : i32
    return %c0_i32, %c0_i32_0 : i32, i32
  }
  func.func @transform_3(%arg0: i32) -> (i32, i32) {
    %c0_i32 = arith.constant 0 : i32
    %c0_i32_0 = arith.constant 0 : i32
    %c0_i32_1 = arith.constant 0 : i32
    return %c0_i32, %c0_i32_0 : i32, i32
  }
  func.func @transform_4(%arg0: i32) -> (i32, i32) {
    %c0_i32 = arith.constant 0 : i32
    %c0_i32_0 = arith.constant 0 : i32
    %c0_i32_1 = arith.constant 0 : i32
    return %c0_i32, %c0_i32_0 : i32, i32
  }
  func.func @transform_5(%arg0: i32) -> (i32, i32) {
    %c0_i32 = arith.constant 0 : i32
    %c0_i32_0 = arith.constant 0 : i32
    %c0_i32_1 = arith.constant 0 : i32
    return %c0_i32, %c0_i32_0 : i32, i32
  }
  func.func @transform_6(%arg0: i32) -> (i32, i32) {
    %c0_i32 = arith.constant 0 : i32
    %c0_i32_0 = arith.constant 0 : i32
    %c0_i32_1 = arith.constant 0 : i32
    return %c0_i32, %c0_i32_0 : i32, i32
  }
  func.func @transform_7(%arg0: i32) -> (i32, i32) {
    %c0_i32 = arith.constant 0 : i32
    %c0_i32_0 = arith.constant 0 : i32
    return %arg0, %c0_i32 : i32, i32
  }
}

</mosaic_0001>

<llo_original>
// kernel: tpu_custom_call.1
$region0: #{tpu_custom_call.1}
  #allocation0 [shape = 'u32[]', space=smem, size = 0x4, offset = 0x4, fixed_abs, tag = 'smem constant byte address 0x4 - core index']
  #allocation1 [shape = 'u32[144,128]{1,0:T(1,128)}', space=vmem, size = 0x12000, scoped, tag = 'internal scratch']
  %s0 = inlined_call_operand.vmem [shape: f32[16,32], index: 0, kind: input, shape index: {}]
  %s1 = inlined_call_operand.vmem [shape: f32[32,64], index: 1, kind: input, shape index: {}]
  %s2 = inlined_call_operand.vmem [shape: f32[1,64], index: 2, kind: input, shape index: {}]
  %s3 = inlined_call_operand.vmem [shape: f32[64,32], index: 3, kind: input, shape index: {}]
  %s4 = inlined_call_operand.vmem [shape: f32[1,32], index: 4, kind: input, shape index: {}]
  %s5 = inlined_call_operand.vmem [shape: f32[1,32], index: 5, kind: input, shape index: {}]
  %s6 = inlined_call_operand.vmem [shape: f32[1,32], index: 6, kind: input, shape index: {}]
  %s7 = inlined_call_operand.hbm [shape: f32[16,32], index: 7, kind: output, shape index: {}]
  %s8 = sld [smem:[#allocation0]]
  $region38: #{tpu_custom_call.1} parent=0
    _
  %s10 = ssub.s32 1, %s8
  %s11 = scalar_select 0, %s10, %s8
  $region1: #{tpu_custom_call.1} parent=0
    #allocation2 [shape = 'u8[8192]{0}', space=vmem, size = 0x2000, scoped, tag = 'output window, operand 0, single buffered']
    #allocation3 [shape = 's32[1]{0}', space=sflag, size = 0x4, scoped, tag = 'scoped memory for tpu_custom_call.1']
    %12 = vsyncpa [#allocation3], 0
    // Predicated region
    $region2: #{tpu_custom_call.1} parent=1 // pred_check
      _
    $region3: #{tpu_custom_call.1} parent=1 // pred_check_branch
      %14 = sbr.rel (0) target = $region5
    $region4: #{tpu_custom_call.1} parent=1 // pred_region
      _
    $region5: #{tpu_custom_call.1} parent=1 // pred_fallthru
      _
    // Predicated region
    $region6: #{tpu_custom_call.1} parent=1 // pred_check
      _
    $region7: #{tpu_custom_call.1} parent=1 // pred_check_branch
      %16 = sbr.rel (0) target = $region9
    $region8: #{tpu_custom_call.1} parent=1 // pred_region
      _
    $region9: #{tpu_custom_call.1} parent=1 // pred_fallthru
      _
    // Predicated region
    $region10: #{tpu_custom_call.1} parent=1 // pred_check
      _
    $region11: #{tpu_custom_call.1} parent=1 // pred_check_branch
      %18 = sbr.rel (0) target = $region13
    $region12: #{tpu_custom_call.1} parent=1 // pred_region
      _
    $region13: #{tpu_custom_call.1} parent=1 // pred_fallthru
      _
    // Predicated region
    $region14: #{tpu_custom_call.1} parent=1 // pred_check
      _
    $region15: #{tpu_custom_call.1} parent=1 // pred_check_branch
      %20 = sbr.rel (0) target = $region17
    $region16: #{tpu_custom_call.1} parent=1 // pred_region
      _
    $region17: #{tpu_custom_call.1} parent=1 // pred_fallthru
      _
    // Predicated region
    $region18: #{tpu_custom_call.1} parent=1 // pred_check
      _
    $region19: #{tpu_custom_call.1} parent=1 // pred_check_branch
      %22 = sbr.rel (0) target = $region21
    $region20: #{tpu_custom_call.1} parent=1 // pred_region
      _
    $region21: #{tpu_custom_call.1} parent=1 // pred_fallthru
      _
    // Predicated region
    $region22: #{tpu_custom_call.1} parent=1 // pred_check
      _
    $region23: #{tpu_custom_call.1} parent=1 // pred_check_branch
      %24 = sbr.rel (0) target = $region25
    $region24: #{tpu_custom_call.1} parent=1 // pred_region
      _
    $region25: #{tpu_custom_call.1} parent=1 // pred_fallthru
      _
    // Predicated region
    $region26: #{tpu_custom_call.1} parent=1 // pred_check
      _
    $region27: #{tpu_custom_call.1} parent=1 // pred_check_branch
      %26 = sbr.rel (0) target = $region29
    $region28: #{tpu_custom_call.1} parent=1 // pred_region
      _
    $region29: #{tpu_custom_call.1} parent=1 // pred_fallthru
      _
    %v27 = vld [vmem:[%s0] sm:$0xff]
    %v28 = vld [vmem:[%s0 + $0x8] sm:$0xff]
    %v29 = vld [vmem:[%s1] sm:$0xff]
    %v30 = vld [vmem:[%s1 + $0x8] sm:$0xff]
    %v31 = vld [vmem:[%s1 + $0x10] sm:$0xff]
    %v32 = vld [vmem:[%s1 + $0x18] sm:$0xff]
    %v33 = vld [vmem:[%s2] sm:$0x1]
    %v35 = vlaneseq
    %v36 = vshrl.u32 %v35, 7
    %v37 = vsub.s32 0, %v36
    %v38 = vrot.slane %v33, %v37
    %vm40 = vcmask 261120
    %v42 = vsel %vm40, %v27, 0
    %v45 = vsel %vm40, %v28, 0
    %47 = vmatprep.subr.mxu0 0.0
    %48 = vmatpush1.msra.mxu0 0.0
    %49 = vmatprep.subr.mxu0 0.0
    %50 = vmatpush1.msra.mxu0 0.0
    %51 = vmatprep.subr.mxu0 0.0
    %52 = vmatpush1.msra.mxu0 0.0
    %53 = vmatprep.subr.mxu0 0.0
    %54 = vmatpush1.msra.mxu0 0.0
    %55 = vmatprep.subr.mxu0 0.0
    %56 = vmatpush1.msra.mxu0 0.0
    %57 = vmatprep.subr.mxu0 0.0
    %58 = vmatpush1.msra.mxu0 0.0
    %59 = vmatprep.subr.mxu0 0.0
    %60 = vmatpush1.msra.mxu0 0.0
    %61 = vmatprep.subr.mxu0 0.0
    %62 = vmatpush1.msra.mxu0 0.0
    %63 = vmatprep.subr.mxu0 0.0
    %64 = vmatpush1.msra.mxu0 0.0
    %65 = vmatprep.subr.mxu0 0.0
    %66 = vmatpush1.msra.mxu0 0.0
    %67 = vmatprep.subr.mxu0 0.0
    %68 = vmatpush1.msra.mxu0 0.0
    %69 = vmatprep.subr.mxu0 0.0
    %70 = vmatpush1.msra.mxu0 0.0
    %71 = vmatprep.subr.mxu0 0.0
    %72 = vmatpush1.msra.mxu0 %v32
    %73 = vmatprep.subr.mxu0 0.0
    %74 = vmatpush1.msra.mxu0 %v31
    %75 = vmatprep.subr.mxu0 0.0
    %76 = vmatpush1.msra.mxu0 %v30
    %77 = vmatprep.subr.mxu0 0.0
    %78 = vmatpush1.msra.mxu0 %v29
    %79 = vmatprep.subr.mxu0 0.0
    %80 = vmatpush2.msra.mxu0 0.0
    %81 = vmatprep.subr.mxu0 0.0
    %82 = vmatpush2.msra.mxu0 0.0
    %83 = vmatprep.subr.mxu0 0.0
    %84 = vmatpush2.msra.mxu0 0.0
    %85 = vmatprep.subr.mxu0 0.0
    %86 = vmatpush2.msra.mxu0 0.0
    %87 = vmatprep.subr.mxu0 0.0
    %88 = vmatpush2.msra.mxu0 0.0
    %89 = vmatprep.subr.mxu0 0.0
    %90 = vmatpush2.msra.mxu0 0.0
    %91 = vmatprep.subr.mxu0 0.0
    %92 = vmatpush2.msra.mxu0 0.0
    %93 = vmatprep.subr.mxu0 0.0
    %94 = vmatpush2.msra.mxu0 0.0
    %95 = vmatprep.subr.mxu0 0.0
    %96 = vmatpush2.msra.mxu0 0.0
    %97 = vmatprep.subr.mxu0 0.0
    %98 = vmatpush2.msra.mxu0 0.0
    %99 = vmatprep.subr.mxu0 0.0
    %100 = vmatpush2.msra.mxu0 0.0
    %101 = vmatprep.subr.mxu0 0.0
    %102 = vmatpush2.msra.mxu0 0.0
    %103 = vmatprep.subr.mxu0 0.0
    %104 = vmatpush2.msra.mxu0 0.0
    %105 = vmatprep.subr.mxu0 0.0
    %106 = vmatpush2.msra.mxu0 0.0
    %107 = vmatprep.subr.mxu0 0.0
    %108 = vmatpush2.msra.mxu0 0.0
    %109 = vmatprep.subr.mxu0 0.0
    %110 = vmatpush2.msra.mxu0 0.0
    %111 = vmatprep.mubr.f32.mxu0 0.0
    %112 = vmatmul.mubr.f32.gmra.mxu0 %v42
    %v113 = vpop.f32.mrf.mxu0
    %v114 = vadd.f32 %v38, %v113
    %v115 = vpop.f32.mrf.mxu0
    %116 = vmatprep.mubr.f32.mxu0 0.0
    %117 = vmatmul.mubr.f32.gmra.mxu0 %v45
    %v118 = vpop.f32.mrf.mxu0
    %v119 = vadd.f32 %v38, %v118
    %v120 = vpop.f32.mrf.mxu0
    %121 = vdwg.mxu0
    %v122 = vmul.f32 %v114, 0.5
    %v123 = vmul.f32 %v119, 0.5
    %v124 = vmul.f32 %v114, 0.70710677
    %v125 = vmul.f32 %v119, 0.70710677
    %v126 = verf.f32.pop %v124
    %v127 = verf.f32.pop %v125
    %v128 = vadd.f32 %v126, 1.0
    %v129 = vadd.f32 %v127, 1.0
    %v130 = vmul.f32 %v122, %v128
    %v131 = vmul.f32 %v123, %v129
    %v132 = vld [vmem:[%s3] sm:$0xff]
    %v133 = vld [vmem:[%s3 + $0x8] sm:$0xff]
    %v134 = vld [vmem:[%s3 + $0x10] sm:$0xff]
    %v135 = vld [vmem:[%s3 + $0x18] sm:$0xff]
    %v136 = vld [vmem:[%s3 + $0x20] sm:$0xff]
    %v137 = vld [vmem:[%s3 + $0x28] sm:$0xff]
    %v138 = vld [vmem:[%s3 + $0x30] sm:$0xff]
    %v139 = vld [vmem:[%s3 + $0x38] sm:$0xff]
    %v140 = vld [vmem:[%s4] sm:$0x1]
    %v142 = vlaneseq
    %v143 = vshrl.u32 %v142, 7
    %v144 = vsub.s32 0, %v143
    %v145 = vrot.slane %v140, %v144
    %vm147 = vcmask 523264
    %v149 = vsel %vm147, %v130, 0
    %v152 = vsel %vm147, %v131, 0
    %154 = vmatprep.subr.mxu0 0.0
    %155 = vmatpush1.msra.mxu0 0.0
    %156 = vmatprep.subr.mxu0 0.0
    %157 = vmatpush1.msra.mxu0 0.0
    %158 = vmatprep.subr.mxu0 0.0
    %159 = vmatpush1.msra.mxu0 0.0
    %160 = vmatprep.subr.mxu0 0.0
    %161 = vmatpush1.msra.mxu0 0.0
    %162 = vmatprep.subr.mxu0 0.0
    %163 = vmatpush1.msra.mxu0 0.0
    %164 = vmatprep.subr.mxu0 0.0
    %165 = vmatpush1.msra.mxu0 0.0
    %166 = vmatprep.subr.mxu0 0.0
    %167 = vmatpush1.msra.mxu0 0.0
    %168 = vmatprep.subr.mxu0 0.0
    %169 = vmatpush1.msra.mxu0 0.0
    %170 = vmatprep.subr.mxu0 0.0
    %171 = vmatpush1.msra.mxu0 %v139
    %172 = vmatprep.subr.mxu0 0.0
    %173 = vmatpush1.msra.mxu0 %v138
    %174 = vmatprep.subr.mxu0 0.0
    %175 = vmatpush1.msra.mxu0 %v137
    %176 = vmatprep.subr.mxu0 0.0
    %177 = vmatpush1.msra.mxu0 %v136
    %178 = vmatprep.subr.mxu0 0.0
    %179 = vmatpush1.msra.mxu0 %v135
    %180 = vmatprep.subr.mxu0 0.0
    %181 = vmatpush1.msra.mxu0 %v134
    %182 = vmatprep.subr.mxu0 0.0
    %183 = vmatpush1.msra.mxu0 %v133
    %184 = vmatprep.subr.mxu0 0.0
    %185 = vmatpush1.msra.mxu0 %v132
    %186 = vmatprep.subr.mxu0 0.0
    %187 = vmatpush2.msra.mxu0 0.0
    %188 = vmatprep.subr.mxu0 0.0
    %189 = vmatpush2.msra.mxu0 0.0
    %190 = vmatprep.subr.mxu0 0.0
    %191 = vmatpush2.msra.mxu0 0.0
    %192 = vmatprep.subr.mxu0 0.0
    %193 = vmatpush2.msra.mxu0 0.0
    %194 = vmatprep.subr.mxu0 0.0
    %195 = vmatpush2.msra.mxu0 0.0
    %196 = vmatprep.subr.mxu0 0.0
    %197 = vmatpush2.msra.mxu0 0.0
    %198 = vmatprep.subr.mxu0 0.0
    %199 = vmatpush2.msra.mxu0 0.0
    %200 = vmatprep.subr.mxu0 0.0
    %201 = vmatpush2.msra.mxu0 0.0
    %202 = vmatprep.subr.mxu0 0.0
    %203 = vmatpush2.msra.mxu0 0.0
    %204 = vmatprep.subr.mxu0 0.0
    %205 = vmatpush2.msra.mxu0 0.0
    %206 = vmatprep.subr.mxu0 0.0
    %207 = vmatpush2.msra.mxu0 0.0
    %208 = vmatprep.subr.mxu0 0.0
    %209 = vmatpush2.msra.mxu0 0.0
    %210 = vmatprep.subr.mxu0 0.0
    %211 = vmatpush2.msra.mxu0 0.0
    %212 = vmatprep.subr.mxu0 0.0
    %213 = vmatpush2.msra.mxu0 0.0
    %214 = vmatprep.subr.mxu0 0.0
    %215 = vmatpush2.msra.mxu0 0.0
    %216 = vmatprep.subr.mxu0 0.0
    %217 = vmatpush2.msra.mxu0 0.0
    %218 = vmatprep.mubr.f32.mxu0 0.0
    %219 = vmatmul.mubr.f32.gmra.mxu0 %v149
    %v220 = vpop.f32.mrf.mxu0
    %v221 = vadd.f32 %v145, %v220
    %v222 = vpop.f32.mrf.mxu0
    %223 = vmatprep.mubr.f32.mxu0 0.0
    %224 = vmatmul.mubr.f32.gmra.mxu0 %v152
    %v225 = vpop.f32.mrf.mxu0
    %v226 = vadd.f32 %v145, %v225
    %v227 = vpop.f32.mrf.mxu0
    %228 = vdwg.mxu0
    %v229 = vld [vmem:[%s5] sm:$0x1]
    %v230 = vld [vmem:[%s6] sm:$0x1]
    %v231 = vadd.f32 %v221, %v27
    %v232 = vadd.f32 %v226, %v28
    %v233 = vsel %vm40, %v231, 0.0
    %234 = vadd.xlane.f32.xlu0 %v233
    %v235 = vpop.xlane.xlu0 %234
    %v236 = vsel %vm40, %v232, 0.0
    %237 = vadd.xlane.f32.xlu0 %v236
    %v238 = vpop.xlane.xlu0 %237
    %v239 = vrcp.pop 32.0
    %v240 = vmul.f32 %v235, %v239
    %v241 = vmul.f32 %v238, %v239
    %v242 = vsub.f32 %v231, %v240
    %v243 = vsub.f32 %v232, %v241
    %v244 = vmul.f32 %v242, %v242
    %v245 = vmul.f32 %v243, %v243
    %v246 = vsel %vm40, %v244, 0.0
    %247 = vadd.xlane.f32.xlu0 %v246
    %v248 = vpop.xlane.xlu0 %247
    %v249 = vsel %vm40, %v245, 0.0
    %250 = vadd.xlane.f32.xlu0 %v249
    %v251 = vpop.xlane.xlu0 %250
    %v252 = vmul.f32 %v248, %v239
    %v253 = vmul.f32 %v251, %v239
    %v254 = vadd.f32 %v252, 1e-12
    %v255 = vadd.f32 %v253, 1e-12
    %v256 = vrsqrt.pop %v254
    %v257 = vrsqrt.pop %v255
    %v258 = vmul.f32 %v242, %v256
    %v259 = vmul.f32 %v243, %v257
    %v261 = vlaneseq
    %v262 = vshrl.u32 %v261, 7
    %v263 = vsub.s32 0, %v262
    %v264 = vrot.slane %v229, %v263
    %v266 = vmul.f32 %v258, %v264
    %v267 = vmul.f32 %v259, %v264
    %v269 = vlaneseq
    %v270 = vshrl.u32 %v269, 7
    %v271 = vsub.s32 0, %v270
    %v272 = vrot.slane %v230, %v271
    %v274 = vadd.f32 %v266, %v272
    %v275 = vadd.f32 %v267, %v272
    %276 = vst.msk [vmem:[#allocation2] sm:$0xff] %vm40, %v274
    %277 = vst.msk [vmem:[#allocation2 + $0x8] sm:$0xff] %vm40, %v275
    // Predicated region
    $region30: #{tpu_custom_call.1} parent=1 // pred_check
      _
    $region31: #{tpu_custom_call.1} parent=1 // pred_check_branch
      %279 = sbr.rel (0) target = $region33
    $region32: #{tpu_custom_call.1} parent=1 // pred_region
      %s281 = ssub.s32 256, 256
      %282 = vsyncadd [#allocation3], %s281
      %s283 = sshll.u32 [#allocation2], 4
      %s284 = int_to_ptr.vmem [resolvable:$true] %s283
      %289 = dma.vmem_to_hbm [thread:$0]  %s284, 256, %s7, [#allocation3], 128, 128, 8
    $region33: #{tpu_custom_call.1} parent=1 // pred_fallthru
      _
    // Predicated region
    $region34: #{tpu_custom_call.1} parent=1 // pred_check
      _
    $region35: #{tpu_custom_call.1} parent=1 // pred_check_branch
      %291 = sbr.rel (0) target = $region37
    $region36: #{tpu_custom_call.1} parent=1 // pred_region
      %292 = dma.done [#allocation3], 256
    $region37: #{tpu_custom_call.1} parent=1 // pred_fallthru
      _
    %293 = vsyncpa [#allocation3], 1

</llo_original>
